<compile_context>
chip_gen: v5e
topology: v5e:2x2
jax: 0.10.0
libtpu: 0.0.40
codegen_flags: <defaults>
</compile_context>

<pallas_src>
import functools
import math

import numpy as np

import jax
import jax.numpy as jnp
from jax.experimental import pallas as pl
from jax.experimental.pallas import tpu as pltpu


# ----------------------------------------------------------------------------
# Host-side (NumPy) precomputation of the interpolation plan
# ----------------------------------------------------------------------------
def _source_indices(t_in: int, ratio: float):
    """Per-output-row (i0, i1, lambda1) exactly matching torch upsample_linear1d
    with align_corners=False and the scale_factor path."""
    t_out = int(math.floor(t_in * ratio))
    if t_out < 1:
        raise ValueError(f"interpolate: ratio={ratio} gives empty output for T={t_in}")
    if t_out == t_in:
        # torch short-circuits to identity when output_size == input_size
        i0 = np.arange(t_out, dtype=np.int32)
        return t_out, i0, i0.copy(), np.zeros(t_out, dtype=np.float32)
    o = np.arange(t_out, dtype=np.float64)
    src = (o + 0.5) / ratio - 0.5
    src = np.maximum(src, 0.0)
    i0 = np.minimum(np.floor(src).astype(np.int64), t_in - 1)
    i1 = np.minimum(i0 + 1, t_in - 1)
    lam1 = (src - i0).astype(np.float32)
    return t_out, i0.astype(np.int32), i1.astype(np.int32), lam1


@functools.lru_cache(maxsize=None)
def _interp_plan(t_in: int, ratio: float, c: int, itemsize: int):
    t_out, i0, i1, lam1 = _source_indices(t_in, ratio)

    # --- output tile height tq: big (amortize ~0.35us/step), VMEM-aware cap ---
    bytes_per_row = max(1, c * itemsize)
    cap = (2 * 1024 * 1024) // bytes_per_row          # ~2 MiB per streamed block
    cap = max(8, min(512, (cap // 8) * 8))
    tq = min(cap, t_out)
    if math.ceil(tq / ratio) + 2 > cap:               # bound the input window too
        tq = min(tq, max(8, (int(cap * ratio) // 8) * 8))
    if tq < t_out:
        tq = max(8, (tq // 8) * 8)                    # sublane-aligned tile
    else:
        tq = t_out                                    # single full tile (exempt)
    n_tiles = -(-t_out // tq)

    # Pad per-row metadata to whole tiles (edge replicate: padded rows recompute
    # the last valid row and their stores are discarded by Pallas).
    pad = n_tiles * tq - t_out
    i0p = np.pad(i0, (0, pad), mode="edge").reshape(n_tiles, tq)
    i1p = np.pad(i1, (0, pad), mode="edge").reshape(n_tiles, tq)
    lmp = np.pad(lam1, (0, pad), mode="edge").reshape(n_tiles, tq)

    # --- input window: per tile, rows [i0p[j,0], i1p[j,-1]] are needed ---
    span = int((i1p[:, -1] - i0p[:, 0] + 1).max())
    tk = -(-span // 8) * 8
    if tk >= t_in:
        tk = t_in                                     # dense fallback (small T)
    n_blocks = -(-t_in // tk)
    two_win = n_blocks > 1

    kb0 = (i0p[:, 0] // tk).astype(np.int32)
    kb1 = np.minimum(kb0 + 1, n_blocks - 1).astype(np.int32)
    loc0 = (i0p - kb0[:, None] * tk).astype(np.int32)  # window-local indices
    loc1 = (i1p - kb0[:, None] * tk).astype(np.int32)

    # window invariants (host-side sanity checks, run once per shape/ratio)
    assert loc0.min() >= 0 and loc1.max() < 2 * tk
    assert np.all(loc1[kb1 == kb0] < tk)

    return dict(
        t_out=t_out, tq=tq, tk=tk, n_tiles=n_tiles, two_win=two_win,
        kblk=np.stack([kb0, kb1], axis=1).astype(np.int32),   # (J, 2)
        idx0=loc0[..., None], idx1=loc1[..., None],           # (J, tq, 1) int32
        lam=lmp[..., None].astype(np.float32),                # (J, tq, 1) f32
    )


# ----------------------------------------------------------------------------
# Pallas kernel
# ----------------------------------------------------------------------------
def _interp_kernel(kblk_ref, idx0_ref, idx1_ref, lam_ref, x0_ref, *rest,
                   tk, t_in, two_win):
    if two_win:
        x1_ref, o_ref = rest
    else:
        (o_ref,) = rest
        x1_ref = None

    i0 = idx0_ref[0]                    # (tq, 1) int32, window-local source row
    i1 = idx1_ref[0]                    # (tq, 1) int32
    l1 = lam_ref[0]                     # (tq, 1) f32
    l0 = 1.0 - l1
    tq = i0.shape[0]

    col = jax.lax.broadcasted_iota(jnp.int32, (tq, tk), 1)

    # Mask the (possibly) out-of-bounds tail rows of partial edge blocks so that
    # stale VMEM never reaches the MXU (their weights are 0, but 0*NaN = NaN).
    mask_tail = (t_in % tk) != 0
    if mask_tail:
        j = pl.program_id(1)
        row = jax.lax.broadcasted_iota(jnp.int32, (tk, 1), 0)

    def load_window(x_ref, slot):
        x = x_ref[0]                    # (tk, C), activation dtype (no up-cast)
        if mask_tail:
            start = kblk_ref[j, slot] * tk
            x = jnp.where(row + start < t_in, x, 0)
        return x

    x0 = load_window(x0_ref, 0)
    prec = jax.lax.Precision.HIGHEST if x0.dtype == jnp.float32 else None

    # Thin two-hot interpolation band, built in-kernel (VPU) -> no dense W in HBM.
    w0 = jnp.where(col == i0, l0, 0.0) + jnp.where(col == i1, l1, 0.0)
    acc = jnp.dot(w0.astype(x0.dtype), x0,
                  preferred_element_type=jnp.float32, precision=prec)

    if two_win:
        x1 = load_window(x1_ref, 1)
        w1 = (jnp.where(col + tk == i0, l0, 0.0)
              + jnp.where(col + tk == i1, l1, 0.0))
        acc = acc + jnp.dot(w1.astype(x1.dtype), x1,
                            preferred_element_type=jnp.float32, precision=prec)

    o_ref[0] = acc.astype(o_ref.dtype)


# ----------------------------------------------------------------------------
# Wrapper
# ----------------------------------------------------------------------------
@functools.partial(jax.jit, static_argnames=("ratio",))
def _interpolate_pallas(seq: jax.Array, ratio: float) -> jax.Array:
    b, t_in, c = seq.shape
    itemsize = seq.dtype.itemsize
    p = _interp_plan(int(t_in), float(ratio), int(c), int(itemsize))
    t_out, tq, tk = p["t_out"], p["tq"], p["tk"]
    n_tiles, two_win = p["n_tiles"], p["two_win"]

    kblk = jnp.asarray(p["kblk"])       # (J, 2)    int32  (scalar prefetch)
    idx0 = jnp.asarray(p["idx0"])       # (J, tq, 1) int32
    idx1 = jnp.asarray(p["idx1"])       # (J, tq, 1) int32
    lam = jnp.asarray(p["lam"])         # (J, tq, 1) f32

    kernel = functools.partial(_interp_kernel, tk=tk, t_in=t_in, two_win=two_win)

    meta_spec = pl.BlockSpec((1, tq, 1), lambda bi, j, kb: (j, 0, 0))
    x_specs = [pl.BlockSpec((1, tk, c), lambda bi, j, kb: (bi, kb[j, 0], 0))]
    operands = [kblk, idx0, idx1, lam, seq]
    if two_win:
        x_specs.append(pl.BlockSpec((1, tk, c), lambda bi, j, kb: (bi, kb[j, 1], 0)))
        operands.append(seq)

    n_win = 2 if two_win else 1
    cost = pl.CostEstimate(
        flops=2 * b * n_tiles * tq * n_win * tk * c,
        transcendentals=0,
        bytes_accessed=(b * t_in * c + b * t_out * c) * itemsize
                       + 4 * (idx0.size + idx1.size + lam.size + kblk.size),
    )

    return pl.pallas_call(
        kernel,
        out_shape=jax.ShapeDtypeStruct((b, t_out, c), seq.dtype),
        grid_spec=pltpu.PrefetchScalarGridSpec(
            num_scalar_prefetch=1,
            grid=(b, n_tiles),
            in_specs=[meta_spec, meta_spec, meta_spec] + x_specs,
            out_specs=pl.BlockSpec((1, tq, c), lambda bi, j, kb: (bi, j, 0)),
        ),
        compiler_params=pltpu.CompilerParams(
            dimension_semantics=("parallel", "parallel"),
            vmem_limit_bytes=48 * 1024 * 1024,
        ),
        cost_estimate=cost,
    )(*operands)


def interpolate_module(seq: jax.Array, ratio) -> jax.Array:
    """JAX/Pallas equivalent of InterpolateModule.forward (mode='linear')."""
    if ratio == 1:
        return seq
    return _interpolate_pallas(seq, float(ratio))


# ----------------------------------------------------------------------------
# Pure-NumPy reference (exact gather-lerp) for the self-check
# ----------------------------------------------------------------------------
def _reference_interpolate(seq, ratio):
    if ratio == 1:
        return np.asarray(seq)
    t_in = seq.shape[1]
    _, i0, i1, lam1 = _source_indices(int(t_in), float(ratio))
    x = np.asarray(seq, dtype=np.float32)
    lam1 = lam1[None, :, None]
    ref = (1.0 - lam1) * x[:, i0, :] + lam1 * x[:, i1, :]
    return ref.astype(np.asarray(seq).dtype)


if __name__ == "__main__":
    key = jax.random.PRNGKey(0)

    # Small demo shapes consistent with the module: seq (B, T, C)
    B, T, C = 2, 8, 32
    seq = jax.random.normal(key, (B, T, C), dtype=jnp.float32)

    for ratio in (2, 0.5):
        out = jax.block_until_ready(interpolate_module(seq, ratio))
        ref = _reference_interpolate(seq, ratio)
        assert out.shape == ref.shape == (B, int(T * float(ratio)), C), (out.shape, ratio)
        assert np.allclose(np.asarray(out), ref, atol=1e-4, rtol=1e-4), f"ratio={ratio}"

    # A modest case that exercises the banded multi-tile path: several T_out
    # tiles, two-block input windows, partial edge blocks, partial last tile.
    B2, T2, C2 = 2, 300, 128
    seq2 = jax.random.normal(jax.random.PRNGKey(0), (B2, T2, C2), dtype=jnp.float32)
    out2 = jax.block_until_ready(interpolate_module(seq2, 2.5))
    ref2 = _reference_interpolate(seq2, 2.5)
    assert out2.shape == ref2.shape == (B2, 750, C2), out2.shape
    assert np.allclose(np.asarray(out2), ref2, atol=1e-4, rtol=1e-4)

    # ratio == 1 passthrough
    out1 = jax.block_until_ready(interpolate_module(seq, 1))
    assert out1.shape == seq.shape and jnp.allclose(out1, seq)

    print("KERNEL_OK")
</pallas_src>

<mosaic_0001>
module attributes {stable_mosaic.version = 11 : i64} {
  func.func @_interp_kernel(%arg0: i32, %arg1: i32, %arg2: memref<1x2xi32, #tpu.memory_space<smem>>, %arg3: memref<1x16x1xi32, #tpu.memory_space<vmem>>, %arg4: memref<1x16x1xi32, #tpu.memory_space<vmem>>, %arg5: memref<1x16x1xf32, #tpu.memory_space<vmem>>, %arg6: memref<1x8x32xf32, #tpu.memory_space<vmem>>, %arg7: memref<1x16x32xf32, #tpu.memory_space<vmem>>) attributes {dimension_semantics = [#tpu.dimension_semantics<parallel>, #tpu.dimension_semantics<parallel>], iteration_bounds = array<i64: 2, 1>, scalar_prefetch = 1 : i64, scratch_operands = 0 : i64, tpu.core_type = #tpu.core_type<tc>, window_params = [{transform_indices = @transform_0, window_bounds = array<i64: 1, 16, 1>}, {transform_indices = @transform_1, window_bounds = array<i64: 1, 16, 1>}, {transform_indices = @transform_2, window_bounds = array<i64: 1, 16, 1>}, {transform_indices = @transform_3, window_bounds = array<i64: 1, 8, 32>}, {transform_indices = @transform_4, window_bounds = array<i64: 1, 16, 32>}]} {
    %c0 = arith.constant 0 : index
    %c0_0 = arith.constant 0 : index
    %c0_1 = arith.constant 0 : index
    %0 = vector.load %arg3[%c0, %c0_0, %c0_1] : memref<1x16x1xi32, #tpu.memory_space<vmem>>, vector<1x16x1xi32>
    %1 = vector.shape_cast %0 : vector<1x16x1xi32> to vector<16x1xi32>
    %c0_2 = arith.constant 0 : index
    %c0_3 = arith.constant 0 : index
    %c0_4 = arith.constant 0 : index
    %2 = vector.load %arg4[%c0_2, %c0_3, %c0_4] : memref<1x16x1xi32, #tpu.memory_space<vmem>>, vector<1x16x1xi32>
    %3 = vector.shape_cast %2 : vector<1x16x1xi32> to vector<16x1xi32>
    %c0_5 = arith.constant 0 : index
    %c0_6 = arith.constant 0 : index
    %c0_7 = arith.constant 0 : index
    %4 = vector.load %arg5[%c0_5, %c0_6, %c0_7] : memref<1x16x1xf32, #tpu.memory_space<vmem>>, vector<1x16x1xf32>
    %5 = vector.shape_cast %4 : vector<1x16x1xf32> to vector<16x1xf32>
    %cst = arith.constant 1.000000e+00 : f32
    %6 = vector.broadcast %cst : f32 to vector<16x1xf32>
    %7 = arith.subf %6, %5 : vector<16x1xf32>
    %8 = tpu.iota {dimensions = array<i32: 1>} : vector<16x8xi32>
    %c0_8 = arith.constant 0 : index
    %c0_9 = arith.constant 0 : index
    %c0_10 = arith.constant 0 : index
    %9 = vector.load %arg6[%c0_8, %c0_9, %c0_10] : memref<1x8x32xf32, #tpu.memory_space<vmem>>, vector<1x8x32xf32>
    %10 = vector.shape_cast %9 : vector<1x8x32xf32> to vector<8x32xf32>
    %11 = vector.broadcast %1 : vector<16x1xi32> to vector<16x8xi32>
    %12 = arith.cmpi eq, %8, %11 : vector<16x8xi32>
    %cst_11 = arith.constant 0.000000e+00 : f32
    %13 = vector.shape_cast %7 : vector<16x1xf32> to vector<16x1xf32>
    %14 = vector.broadcast %13 : vector<16x1xf32> to vector<16x8xf32>
    %15 = vector.broadcast %cst_11 : f32 to vector<16x8xf32>
    %16 = arith.select %12, %14, %15 : vector<16x8xi1>, vector<16x8xf32>
    %17 = vector.broadcast %3 : vector<16x1xi32> to vector<16x8xi32>
    %18 = arith.cmpi eq, %8, %17 : vector<16x8xi32>
    %cst_12 = arith.constant 0.000000e+00 : f32
    %19 = vector.shape_cast %5 : vector<16x1xf32> to vector<16x1xf32>
    %20 = vector.broadcast %19 : vector<16x1xf32> to vector<16x8xf32>
    %21 = vector.broadcast %cst_12 : f32 to vector<16x8xf32>
    %22 = arith.select %18, %20, %21 : vector<16x8xi1>, vector<16x8xf32>
    %23 = arith.addf %16, %22 : vector<16x8xf32>
    %cst_13 = arith.constant dense<0.000000e+00> : vector<16x32xf32>
    %24 = tpu.matmul %23, %10, %cst_13 {dimension_numbers = #tpu.dot_dimension_numbers<[1], [0], [0], [1], [0, 0, 1, 1], [], []>, precision = #tpu.contract_precision<fp32>} : vector<16x8xf32>, vector<8x32xf32>, vector<16x32xf32> -> vector<16x32xf32>
    %c0_14 = arith.constant 0 : index
    %c0_15 = arith.constant 0 : index
    %c0_16 = arith.constant 0 : index
    %25 = vector.load %arg7[%c0_14, %c0_15, %c0_16] : memref<1x16x32xf32, #tpu.memory_space<vmem>>, vector<1x16x32xf32>
    %26 = vector.shape_cast %25 : vector<1x16x32xf32> to vector<16x32xf32>
    %27 = vector.shape_cast %24 : vector<16x32xf32> to vector<1x16x32xf32>
    tpu.vector_store %arg7[%c0_14, %c0_15, %c0_16], %27 {strides = array<i32>} : memref<1x16x32xf32, #tpu.memory_space<vmem>>, vector<1x16x32xf32>,
    return
  }
  func.func @transform_0(%arg0: i32, %arg1: i32, %arg2: memref<1x2xi32, #tpu.memory_space<smem>>) -> (i32, i32, i32) {
    %c0_i32 = arith.constant 0 : i32
    %c0_i32_0 = arith.constant 0 : i32
    %c0_i32_1 = arith.constant 0 : i32
    return %arg1, %c0_i32, %c0_i32_0 : i32, i32, i32
  }
  func.func @transform_1(%arg0: i32, %arg1: i32, %arg2: memref<1x2xi32, #tpu.memory_space<smem>>) -> (i32, i32, i32) {
    %c0_i32 = arith.constant 0 : i32
    %c0_i32_0 = arith.constant 0 : i32
    %c0_i32_1 = arith.constant 0 : i32
    return %arg1, %c0_i32, %c0_i32_0 : i32, i32, i32
  }
  func.func @transform_2(%arg0: i32, %arg1: i32, %arg2: memref<1x2xi32, #tpu.memory_space<smem>>) -> (i32, i32, i32) {
    %c0_i32 = arith.constant 0 : i32
    %c0_i32_0 = arith.constant 0 : i32
    %c0_i32_1 = arith.constant 0 : i32
    return %arg1, %c0_i32, %c0_i32_0 : i32, i32, i32
  }
  func.func @transform_3(%arg0: i32, %arg1: i32, %arg2: memref<1x2xi32, #tpu.memory_space<smem>>) -> (i32, i32, i32) {
    %0 = arith.index_cast %arg1 : i32 to index
    %c0 = arith.constant 0 : index
    %1 = memref.load %arg2[%0, %c0] : memref<1x2xi32, #tpu.memory_space<smem>>
    %c0_i32 = arith.constant 0 : i32
    %c0_i32_0 = arith.constant 0 : i32
    return %arg0, %1, %c0_i32 : i32, i32, i32
  }
  func.func @transform_4(%arg0: i32, %arg1: i32, %arg2: memref<1x2xi32, #tpu.memory_space<smem>>) -> (i32, i32, i32) {
    %c0_i32 = arith.constant 0 : i32
    %c0_i32_0 = arith.constant 0 : i32
    return %arg0, %arg1, %c0_i32 : i32, i32, i32
  }
}

</mosaic_0001>

<llo_original>
// kernel: _interpolate_pallas.1
$region0: #{_interpolate_pallas.1}
  #allocation0 [shape = 'u32[]', space=smem, size = 0x4, offset = 0x4, fixed_abs, tag = 'smem constant byte address 0x4 - core index']
  #allocation1 [shape = 'u32[72,128]{1,0:T(1,128)}', space=vmem, size = 0x9000, scoped, tag = 'internal scratch']
  #allocation2 [shape = 's32[1]{0}', space=sflag, size = 0x4, scoped, tag = 'scoped memory for _interpolate_pallas.1']
  #allocation3 [shape = 'u8[512]{0}', space=smem, size = 0x200, scoped, tag = 'prefetched SMEM operand 0']
  %s0 = inlined_call_operand.vmem [shape: s32[1,2], index: 0, kind: input, shape index: {}]
  %s1 = inlined_call_operand.hbm [shape: s32[1,16,1], index: 1, kind: input, shape index: {}]
  %s2 = inlined_call_operand.hbm [shape: s32[1,16,1], index: 2, kind: input, shape index: {}]
  %s3 = inlined_call_operand.hbm [shape: f32[1,16,1], index: 3, kind: input, shape index: {}]
  %s4 = inlined_call_operand.hbm [shape: f32[2,8,32], index: 4, kind: input, shape index: {}]
  %s5 = inlined_call_operand.hbm [shape: f32[2,16,32], index: 5, kind: output, shape index: {}]
  %s6 = sld [smem:[#allocation0]]
  $region65: #{_interpolate_pallas.1} parent=0
    _
  %s8 = ssub.s32 1, %s6
  %s9 = scalar_select 0, %s8, %s6
  %s11 = sshll.u32 %s0, 4
  %s12 = int_to_ptr.vmem [resolvable:$true] %s11
  %14 = dma.vmem_to_smem %s12, 16, [#allocation3], [#allocation2]
  %16 = dma.done [#allocation2], 16
  %17 = sfence
  $region1: #{_interpolate_pallas.1} parent=0
    #allocation4 [shape = 'u8[8192]{0}', space=vmem, size = 0x2000, scoped, tag = 'input window, operand 1, single buffered']
    #allocation5 [shape = 's32[2]{0}', space=sflag, size = 0x8, scoped, tag = 'scoped memory for _interpolate_pallas.1']
    #allocation6 [shape = 's32[2]{0}', space=sflag, size = 0x8, scoped, tag = 'scoped memory for _interpolate_pallas.1']
    #allocation7 [shape = 'u8[8192]{0}', space=vmem, size = 0x2000, scoped, tag = 'input window, operand 2, single buffered']
    #allocation8 [shape = 's32[1]{0}', space=sflag, size = 0x4, scoped, tag = 'scoped memory for _interpolate_pallas.1']
    #allocation9 [shape = 'u8[8192]{0}', space=vmem, size = 0x2000, scoped, tag = 'input window, operand 3, single buffered']
    #allocation10 [shape = 'u8[8192]{0}', space=vmem, size = 0x2000, scoped, tag = 'input window, operand 4']
    #allocation11 [shape = 's32[2]{0}', space=sflag, size = 0x8, scoped, tag = 'scoped memory for _interpolate_pallas.1']
    #allocation12 [shape = 'u8[16384]{0}', space=vmem, size = 0x4000, scoped, tag = 'output window, operand 0']
    %18 = vsyncpa [#allocation5], 0
    %19 = vsyncpa [#allocation8], 0
    %20 = vsyncpa [#allocation11], 0
    %s21 = scalar_lea.sflag [#allocation11], 1
    %22 = vsyncpa %s21, 0
    %23 = vsyncpa [#allocation6], 0
    %s24 = scalar_lea.sflag [#allocation6], 1
    %25 = vsyncpa %s24, 0
    loop: start=0, step=1, limit=4
    $region2: #{_interpolate_pallas.1} parent=1 // loop_pre_header
      _
    $region3: #{_interpolate_pallas.1} parent=1 // loop_header
      %s27 = sphi 0, %s31
      %p28 = scmp.ge.s32.totalorder %s27, 4
      %s34 = sphi 0, %s46
      %s35 = sphi 0, %s42
      %s36 = sphi 0, %s34
      %s37 = sphi 0, %s35
      %s38 = sphi 0, %s36
      %s39 = sphi 0, %s37
      %s49 = sphi 0, %s51
      %s52 = sphi 0, %s49
      %s53 = sphi 0, %s52
      %s69 = sphi 0, %s53
      %s75 = sphi 0, %s77
      %s78 = sphi 0, %s75
      %s79 = sphi 0, %s78
      %s95 = sphi 0, %s79
      %s101 = sphi 0, %s103
      %s104 = sphi 0, %s101
      %s105 = sphi 0, %s104
      %s121 = sphi 0, %s105
      %s133 = sphi 0, %s135
      %s136 = sphi 0, %s133
      %s137 = sphi 0, %s136
      %s153 = sphi 0, %s137
      %s161 = sphi 0, %s163
      %s164 = sphi 0, %s161
      %s165 = sphi 0, %s164
      %s181 = sphi 0, %s165
    $region4: #{_interpolate_pallas.1} parent=1 // loop_header_branch
      %30 = sbr.rel (%p28) target = $region8
    $region5: #{_interpolate_pallas.1} parent=1 // loop_body
      %s32 = ssub.s32 %s27, 1
      %s33 = ssub.s32 %s27, 2
      %s40 = sadd.s32 1, %s35
      %p41 = scmp.ge.s32.totalorder %s40, 1
      %s42 = scalar_select %p41, 0, %s40
      %s43 = sadd.s32 1, %s34
      %s44 = scalar_select %p41, %s43, %s34
      %p45 = scmp.ge.s32.totalorder %s44, 2
      %s46 = scalar_select %p45, 0, %s44
      %s47 = ssub.s32 %s35, %s42
      %p48 = scmp.eq.s32.totalorder %s47, 0
      %s50 = sadd.s32 %s49, 1
      %s51 = scalar_select %p48, %s49, %s50
      %p54 = pneg %p48
      %p55 = scmp.eq.s32.totalorder %s27, 1
      %p56 = por %p54, %p55
      %p57 = scmp.ne.s32.totalorder %s49, %s52
      %p58 = scmp.eq.s32.totalorder %s27, 0
      %p59 = por %p57, %p58
      %p60 = scmp.ne.s32.totalorder %s49, %s52
      %p61 = scmp.eq.s32.totalorder %s32, 1
      %p62 = por %p60, %p61
      %p63 = scmp.ne.s32.totalorder %s52, %s53
      %p64 = scmp.eq.s32.totalorder %s32, 0
      %p65 = por %p63, %p64
      %p66 = scmp.ne.s32.totalorder %s52, %s53
      %p67 = scmp.eq.s32.totalorder %s33, 1
      %p68 = por %p66, %p67
      %p70 = scmp.ne.s32.totalorder %s53, %s69
      %p71 = scmp.eq.s32.totalorder %s33, 0
      %p72 = por %p70, %p71
      %s73 = ssub.s32 %s35, %s42
      %p74 = scmp.eq.s32.totalorder %s73, 0
      %s76 = sadd.s32 %s75, 1
      %s77 = scalar_select %p74, %s75, %s76
      %p80 = pneg %p74
      %p81 = scmp.eq.s32.totalorder %s27, 1
      %p82 = por %p80, %p81
      %p83 = scmp.ne.s32.totalorder %s75, %s78
      %p84 = scmp.eq.s32.totalorder %s27, 0
      %p85 = por %p83, %p84
      %p86 = scmp.ne.s32.totalorder %s75, %s78
      %p87 = scmp.eq.s32.totalorder %s32, 1
      %p88 = por %p86, %p87
      %p89 = scmp.ne.s32.totalorder %s78, %s79
      %p90 = scmp.eq.s32.totalorder %s32, 0
      %p91 = por %p89, %p90
      %p92 = scmp.ne.s32.totalorder %s78, %s79
      %p93 = scmp.eq.s32.totalorder %s33, 1
      %p94 = por %p92, %p93
      %p96 = scmp.ne.s32.totalorder %s79, %s95
      %p97 = scmp.eq.s32.totalorder %s33, 0
      %p98 = por %p96, %p97
      %s99 = ssub.s32 %s35, %s42
      %p100 = scmp.eq.s32.totalorder %s99, 0
      %s102 = sadd.s32 %s101, 1
      %s103 = scalar_select %p100, %s101, %s102
      %p106 = pneg %p100
      %p107 = scmp.eq.s32.totalorder %s27, 1
      %p108 = por %p106, %p107
      %p109 = scmp.ne.s32.totalorder %s101, %s104
      %p110 = scmp.eq.s32.totalorder %s27, 0
      %p111 = por %p109, %p110
      %p112 = scmp.ne.s32.totalorder %s101, %s104
      %p113 = scmp.eq.s32.totalorder %s32, 1
      %p114 = por %p112, %p113
      %p115 = scmp.ne.s32.totalorder %s104, %s105
      %p116 = scmp.eq.s32.totalorder %s32, 0
      %p117 = por %p115, %p116
      %p118 = scmp.ne.s32.totalorder %s104, %s105
      %p119 = scmp.eq.s32.totalorder %s33, 1
      %p120 = por %p118, %p119
      %p122 = scmp.ne.s32.totalorder %s105, %s121
      %p123 = scmp.eq.s32.totalorder %s33, 0
      %p124 = por %p122, %p123
      %s125 = smul.u32 %s35, 128
      %s126 = sld [smem:[#allocation3 + %s125]]
      %s127 = smul.u32 %s42, 128
      %s128 = sld [smem:[#allocation3 + %s127]]
      %s129 = ssub.s32 %s34, %s46
      %s130 = ssub.s32 %s126, %s128
      %s131 = sor.u32 %s129, %s130
      %p132 = scmp.eq.s32.totalorder %s131, 0
      %s134 = sadd.s32 %s133, 1
      %s135 = scalar_select %p132, %s133, %s134
      %p138 = pneg %p132
      %p139 = scmp.eq.s32.totalorder %s27, 1
      %p140 = por %p138, %p139
      %p141 = scmp.ne.s32.totalorder %s133, %s136
      %p142 = scmp.eq.s32.totalorder %s27, 0
      %p143 = por %p141, %p142
      %p144 = scmp.ne.s32.totalorder %s133, %s136
      %p145 = scmp.eq.s32.totalorder %s32, 1
      %p146 = por %p144, %p145
      %p147 = scmp.ne.s32.totalorder %s136, %s137
      %p148 = scmp.eq.s32.totalorder %s32, 0
      %p149 = por %p147, %p148
      %p150 = scmp.ne.s32.totalorder %s136, %s137
      %p151 = scmp.eq.s32.totalorder %s33, 1
      %p152 = por %p150, %p151
      %p154 = scmp.ne.s32.totalorder %s137, %s153
      %p155 = scmp.eq.s32.totalorder %s33, 0
      %p156 = por %p154, %p155
      %s157 = ssub.s32 %s34, %s46
      %s158 = ssub.s32 %s35, %s42
      %s159 = sor.u32 %s157, %s158
      %p160 = scmp.eq.s32.totalorder %s159, 0
      %s162 = sadd.s32 %s161, 1
      %s163 = scalar_select %p160, %s161, %s162
      %p166 = pneg %p160
      %p167 = scmp.eq.s32.totalorder %s27, 1
      %p168 = por %p166, %p167
      %p169 = scmp.ne.s32.totalorder %s161, %s164
      %p170 = scmp.eq.s32.totalorder %s27, 0
      %p171 = por %p169, %p170
      %p172 = scmp.ne.s32.totalorder %s161, %s164
      %p173 = scmp.eq.s32.totalorder %s32, 1
      %p174 = por %p172, %p173
      %p175 = scmp.ne.s32.totalorder %s164, %s165
      %p176 = scmp.eq.s32.totalorder %s32, 0
      %p177 = por %p175, %p176
      %p178 = scmp.ne.s32.totalorder %s164, %s165
      %p179 = scmp.eq.s32.totalorder %s33, 1
      %p180 = por %p178, %p179
      %p182 = scmp.ne.s32.totalorder %s165, %s181
      %p183 = scmp.eq.s32.totalorder %s33, 0
      %p184 = por %p182, %p183
      %p185 = scmp.le.s32.totalorder 1, %s27
      %p186 = scmp.lt.s32.totalorder %s27, 3
      %p187 = pnand %p185, %p186
      %p188 = pneg %p187
      // Predicated region
      $region9: #{_interpolate_pallas.1} parent=5 // pred_check
        _
      $region10: #{_interpolate_pallas.1} parent=5 // pred_check_branch
        %190 = sbr.rel (%p187) target = $region12
      $region11: #{_interpolate_pallas.1} parent=5 // pred_region
        %s191 = ssub.s32 %s27, 1
        // Predicated region
        $region13: #{_interpolate_pallas.1} parent=11 // pred_check
          %p192 = pneg %p65
        $region14: #{_interpolate_pallas.1} parent=11 // pred_check_branch
          %194 = sbr.rel (%p192) target = $region16
        $region15: #{_interpolate_pallas.1} parent=11 // pred_region
          %196 = vsyncadd [#allocation5], 0
          %s197 = smul.addr %s37, 2
          %s198 = smul.addr %s197, 8
          %s199 = scalar_lea.hbm %s1, %s198
          %s200 = sshll.u32 %s199, 4
          %s201 = int_to_ptr.hbm [resolvable:$true] %s200
          %s202 = sshll.u32 [#allocation4], 4
          %s203 = int_to_ptr.vmem [resolvable:$true] %s202
          %208 = dma.hbm_to_vmem [thread:$0]  %s201, 256, %s203, [#allocation5], 128, 128, 8
        $region16: #{_interpolate_pallas.1} parent=11 // pred_fallthru
          _
        // Predicated region
        $region17: #{_interpolate_pallas.1} parent=11 // pred_check
          %p209 = pneg %p91
        $region18: #{_interpolate_pallas.1} parent=11 // pred_check_branch
          %211 = sbr.rel (%p209) target = $region20
        $region19: #{_interpolate_pallas.1} parent=11 // pred_region
          %213 = vsyncadd [#allocation8], 0
          %s214 = smul.addr %s37, 2
          %s215 = smul.addr %s214, 8
          %s216 = scalar_lea.hbm %s2, %s215
          %s217 = sshll.u32 %s216, 4
          %s218 = int_to_ptr.hbm [resolvable:$true] %s217
          %s219 = sshll.u32 [#allocation7], 4
          %s220 = int_to_ptr.vmem [resolvable:$true] %s219
          %225 = dma.hbm_to_vmem [thread:$0]  %s218, 256, %s220, [#allocation8], 128, 128, 8
        $region20: #{_interpolate_pallas.1} parent=11 // pred_fallthru
          _
        // Predicated region
        $region21: #{_interpolate_pallas.1} parent=11 // pred_check
          %p226 = pneg %p117
        $region22: #{_interpolate_pallas.1} parent=11 // pred_check_branch
          %228 = sbr.rel (%p226) target = $region24
        $region23: #{_interpolate_pallas.1} parent=11 // pred_region
          %230 = vsyncadd [#allocation8], 0
          %s231 = smul.addr %s37, 2
          %s232 = smul.addr %s231, 8
          %s233 = scalar_lea.hbm %s3, %s232
          %s234 = sshll.u32 %s233, 4
          %s235 = int_to_ptr.hbm [resolvable:$true] %s234
          %s236 = sshll.u32 [#allocation9], 4
          %s237 = int_to_ptr.vmem [resolvable:$true] %s236
          %242 = dma.hbm_to_vmem [thread:$0]  %s235, 256, %s237, [#allocation8], 128, 128, 8
        $region24: #{_interpolate_pallas.1} parent=11 // pred_fallthru
          _
      $region12: #{_interpolate_pallas.1} parent=5 // pred_fallthru
        _
      %p243 = scmp.lt.s32.totalorder %s27, 2
      // Predicated region
      $region25: #{_interpolate_pallas.1} parent=5 // pred_check
        %p244 = pneg %p243
      $region26: #{_interpolate_pallas.1} parent=5 // pred_check_branch
        %246 = sbr.rel (%p244) target = $region28
      $region27: #{_interpolate_pallas.1} parent=5 // pred_region
        // Predicated region
        $region29: #{_interpolate_pallas.1} parent=27 // pred_check
          %p247 = pneg %p143
        $region30: #{_interpolate_pallas.1} parent=27 // pred_check_branch
          %249 = sbr.rel (%p247) target = $region32
        $region31: #{_interpolate_pallas.1} parent=27 // pred_region
          %s250 = sand.u32 %s133, 1
          %s251 = scalar_lea.sflag [#allocation11], %s250
          %s252 = sand.u32 %s133, 1
          %s253 = smul.addr %s252, 8
          %s254 = scalar_lea.vmem [#allocation10], %s253
          %s255 = smul.u32 %s35, 128
          %s256 = sld [smem:[#allocation3 + %s255]]
          %258 = vsyncadd %s251, 0
          %s259 = sadd.s32 %s256, %s34
          %s260 = smul.addr %s259, 8
          %s261 = scalar_lea.hbm %s4, %s260
          %s263 = sshll.u32 %s261, 4
          %s264 = int_to_ptr.hbm [resolvable:$true] %s263
          %s265 = sshll.u32 %s254, 4
          %s266 = int_to_ptr.vmem [resolvable:$true] %s265
          %268 = dma.hbm_to_vmem [thread:$0]  %s264, 128, %s266, %s251
        $region32: #{_interpolate_pallas.1} parent=27 // pred_fallthru
          _
      $region28: #{_interpolate_pallas.1} parent=5 // pred_fallthru
        _
      %p269 = scmp.le.s32.totalorder 1, %s27
      %p270 = scmp.lt.s32.totalorder %s27, 3
      %p271 = pnand %p269, %p270
      %p272 = pneg %p271
      // Predicated region
      $region33: #{_interpolate_pallas.1} parent=5 // pred_check
        _
      $region34: #{_interpolate_pallas.1} parent=5 // pred_check_branch
        %274 = sbr.rel (%p271) target = $region36
      $region35: #{_interpolate_pallas.1} parent=5 // pred_region
        %s275 = ssub.s32 %s27, 1
        // Predicated region
        $region37: #{_interpolate_pallas.1} parent=35 // pred_check
          %p276 = pneg %p65
        $region38: #{_interpolate_pallas.1} parent=35 // pred_check_branch
          %278 = sbr.rel (%p276) target = $region40
        $region39: #{_interpolate_pallas.1} parent=35 // pred_region
          %280 = dma.done [#allocation5], 256
        $region40: #{_interpolate_pallas.1} parent=35 // pred_fallthru
          _
        // Predicated region
        $region41: #{_interpolate_pallas.1} parent=35 // pred_check
          %p281 = pneg %p91
        $region42: #{_interpolate_pallas.1} parent=35 // pred_check_branch
          %283 = sbr.rel (%p281) target = $region44
        $region43: #{_interpolate_pallas.1} parent=35 // pred_region
          %285 = dma.done [#allocation8], 256
        $region44: #{_interpolate_pallas.1} parent=35 // pred_fallthru
          _
        // Predicated region
        $region45: #{_interpolate_pallas.1} parent=35 // pred_check
          %p286 = pneg %p117
        $region46: #{_interpolate_pallas.1} parent=35 // pred_check_branch
          %288 = sbr.rel (%p286) target = $region48
        $region47: #{_interpolate_pallas.1} parent=35 // pred_region
          %290 = dma.done [#allocation8], 256
        $region48: #{_interpolate_pallas.1} parent=35 // pred_fallthru
          _
        %s291 = sand.u32 %s136, 1
        %s292 = scalar_lea.sflag [#allocation11], %s291
        %s293 = sand.u32 %s136, 1
        %s294 = smul.addr %s293, 8
        %s295 = scalar_lea.vmem [#allocation10], %s294
        // Predicated region
        $region49: #{_interpolate_pallas.1} parent=35 // pred_check
          %p296 = pneg %p149
        $region50: #{_interpolate_pallas.1} parent=35 // pred_check_branch
          %298 = sbr.rel (%p296) target = $region52
        $region51: #{_interpolate_pallas.1} parent=35 // pred_region
          %300 = dma.done %s292, 128
        $region52: #{_interpolate_pallas.1} parent=35 // pred_fallthru
          _
        %p301 = pneg %p65
        %p302 = pneg %p62
        %p303 = pneg %p91
        %p304 = pneg %p88
        %p305 = pneg %p117
        %p306 = pneg %p114
        %s307 = sand.u32 %s136, 1
        %s308 = scalar_lea.sflag [#allocation11], %s307
        %s309 = sand.u32 %s136, 1
        %s310 = smul.addr %s309, 8
        %s311 = scalar_lea.vmem [#allocation10], %s310
        %p312 = pneg %p149
        %p313 = pneg %p146
        %p314 = pneg %p177
        %p315 = pneg %p174
        %s316 = sand.u32 %s164, 1
        %s317 = scalar_lea.sflag [#allocation6], %s316
        %s318 = sand.u32 %s164, 1
        %s319 = smul.addr %s318, 16
        %s320 = scalar_lea.vmem [#allocation12], %s319
        %s321 = smul.u32 %s37, 128
        %s322 = sld [smem:[#allocation3 + %s321]]
        %s323 = smul.u32 2, %s37
        %v324 = vld [vmem:[#allocation4] sm:$0xff]
        %v325 = vld [vmem:[#allocation4 + $0x8] sm:$0xff]
        %v326 = vld [vmem:[#allocation7] sm:$0xff]
        %v327 = vld [vmem:[#allocation7 + $0x8] sm:$0xff]
        %v328 = vld [vmem:[#allocation9] sm:$0xff]
        %v329 = vld [vmem:[#allocation9 + $0x8] sm:$0xff]
        %v330 = vsub.f32 1.0, %v328
        %v331 = vsub.f32 1.0, %v329
        %v332 = vlaneseq
        %v333 = vand.u32 %v332, 127
        %v334 = vld [vmem:[%s295] sm:$0xff]
        %335 = vset.pattern.permute.xlu0 0
        %336 = vperm.xlu0 %335, %v324
        %v337 = vpop.permute.xlu0 %336
        %338 = vset.pattern.permute.xlu0 0
        %339 = vperm.xlu0 %338, %v325
        %v340 = vpop.permute.xlu0 %339
        %vm341 = vcmp.eq.s32.totalorder %v333, %v337
        %vm342 = vcmp.eq.s32.totalorder %v333, %v340
        %344 = vset.pattern.permute.xlu0 0
        %345 = vperm.xlu0 %344, %v330
        %v346 = vpop.permute.xlu0 %345
        %349 = vset.pattern.permute.xlu0 0
        %350 = vperm.xlu0 %349, %v331
        %v351 = vpop.permute.xlu0 %350
        %v353 = vsel %vm341, %v346, 0.0
        %v354 = vsel %vm342, %v351, 0.0
        %355 = vset.pattern.permute.xlu0 0
        %356 = vperm.xlu0 %355, %v326
        %v357 = vpop.permute.xlu0 %356
        %358 = vset.pattern.permute.xlu0 0
        %359 = vperm.xlu0 %358, %v327
        %v360 = vpop.permute.xlu0 %359
        %vm361 = vcmp.eq.s32.totalorder %v333, %v357
        %vm362 = vcmp.eq.s32.totalorder %v333, %v360
        %364 = vset.pattern.permute.xlu0 0
        %365 = vperm.xlu0 %364, %v328
        %v366 = vpop.permute.xlu0 %365
        %369 = vset.pattern.permute.xlu0 0
        %370 = vperm.xlu0 %369, %v329
        %v371 = vpop.permute.xlu0 %370
        %v373 = vsel %vm361, %v366, 0.0
        %v374 = vsel %vm362, %v371, 0.0
        %v375 = vadd.f32 %v353, %v373
        %v376 = vadd.f32 %v354, %v374
        %vm377 = vcmask 64512
        %v379 = vsel %vm377, %v375, 0
        %v382 = vsel %vm377, %v376, 0
        %384 = vmatpush.msra.mxu0 0.0
        %385 = vmatpush.msra.mxu0 0.0
        %386 = vmatpush.msra.mxu0 0.0
        %387 = vmatpush.msra.mxu0 0.0
        %388 = vmatpush.msra.mxu0 0.0
        %389 = vmatpush.msra.mxu0 0.0
        %390 = vmatpush.msra.mxu0 0.0
        %391 = vmatpush.msra.mxu0 0.0
        %392 = vmatpush.msra.mxu0 0.0
        %393 = vmatpush.msra.mxu0 0.0
        %394 = vmatpush.msra.mxu0 0.0
        %395 = vmatpush.msra.mxu0 0.0
        %396 = vmatpush.msra.mxu0 0.0
        %397 = vmatpush.msra.mxu0 0.0
        %398 = vmatpush.msra.mxu0 0.0
        %v399 = vand.u32 %v334, 4294901760
        %400 = vmatpush.msra.mxu0 %v399
        %v401 = vand.u32 %v379, 4294901760
        %v402 = vsub.f32 %v379, %v401
        %v403 = vand.u32 %v402, 4294901760
        %v404 = vsub.f32 %v402, %v403
        %v405 = vand.u32 %v404, 4294901760
        %406 = vmatmul.f32.gmra.mxu0 %v405
        %v407 = vpop.f32.mrf.mxu0
        %v408 = vadd.f32 0.0, %v407
        %v409 = vand.u32 %v382, 4294901760
        %v410 = vsub.f32 %v382, %v409
        %v411 = vand.u32 %v410, 4294901760
        %v412 = vsub.f32 %v410, %v411
        %v413 = vand.u32 %v412, 4294901760
        %414 = vmatmul.f32.gmra.mxu0 %v413
        %v415 = vpop.f32.mrf.mxu0
        %v416 = vadd.f32 0.0, %v415
        %417 = vdwg.mxu0
        %418 = vmatpush.msra.mxu0 0.0
        %419 = vmatpush.msra.mxu0 0.0
        %420 = vmatpush.msra.mxu0 0.0
        %421 = vmatpush.msra.mxu0 0.0
        %422 = vmatpush.msra.mxu0 0.0
        %423 = vmatpush.msra.mxu0 0.0
        %424 = vmatpush.msra.mxu0 0.0
        %425 = vmatpush.msra.mxu0 0.0
        %426 = vmatpush.msra.mxu0 0.0
        %427 = vmatpush.msra.mxu0 0.0
        %428 = vmatpush.msra.mxu0 0.0
        %429 = vmatpush.msra.mxu0 0.0
        %430 = vmatpush.msra.mxu0 0.0
        %431 = vmatpush.msra.mxu0 0.0
        %432 = vmatpush.msra.mxu0 0.0
        %v433 = vand.u32 %v334, 4294901760
        %v434 = vsub.f32 %v334, %v433
        %v435 = vand.u32 %v434, 4294901760
        %v436 = vsub.f32 %v434, %v435
        %v437 = vand.u32 %v436, 4294901760
        %438 = vmatpush.msra.mxu0 %v437
        %v439 = vand.u32 %v379, 4294901760
        %440 = vmatmul.f32.gmra.mxu0 %v439
        %v441 = vpop.f32.mrf.mxu0
        %v442 = vadd.f32 %v408, %v441
        %v443 = vand.u32 %v382, 4294901760
        %444 = vmatmul.f32.gmra.mxu0 %v443
        %v445 = vpop.f32.mrf.mxu0
        %v446 = vadd.f32 %v416, %v445
        %447 = vdwg.mxu0
        %448 = vmatpush.msra.mxu0 0.0
        %449 = vmatpush.msra.mxu0 0.0
        %450 = vmatpush.msra.mxu0 0.0
        %451 = vmatpush.msra.mxu0 0.0
        %452 = vmatpush.msra.mxu0 0.0
        %453 = vmatpush.msra.mxu0 0.0
        %454 = vmatpush.msra.mxu0 0.0
        %455 = vmatpush.msra.mxu0 0.0
        %456 = vmatpush.msra.mxu0 0.0
        %457 = vmatpush.msra.mxu0 0.0
        %458 = vmatpush.msra.mxu0 0.0
        %459 = vmatpush.msra.mxu0 0.0
        %460 = vmatpush.msra.mxu0 0.0
        %461 = vmatpush.msra.mxu0 0.0
        %462 = vmatpush.msra.mxu0 0.0
        %v463 = vand.u32 %v334, 4294901760
        %v464 = vsub.f32 %v334, %v463
        %465 = vmatpush.msra.mxu0 %v464
        %v466 = vand.u32 %v379, 4294901760
        %v467 = vsub.f32 %v379, %v466
        %468 = vmatmul.f32.gmra.mxu0 %v467
        %v469 = vpop.f32.mrf.mxu0
        %v470 = vadd.f32 %v442, %v469
        %v471 = vand.u32 %v382, 4294901760
        %v472 = vsub.f32 %v382, %v471
        %473 = vmatmul.f32.gmra.mxu0 %v472
        %v474 = vpop.f32.mrf.mxu0
        %v475 = vadd.f32 %v446, %v474
        %476 = vdwg.mxu0
        %477 = vmatpush.msra.mxu0 0.0
        %478 = vmatpush.msra.mxu0 0.0
        %479 = vmatpush.msra.mxu0 0.0
        %480 = vmatpush.msra.mxu0 0.0
        %481 = vmatpush.msra.mxu0 0.0
        %482 = vmatpush.msra.mxu0 0.0
        %483 = vmatpush.msra.mxu0 0.0
        %484 = vmatpush.msra.mxu0 0.0
        %485 = vmatpush.msra.mxu0 0.0
        %486 = vmatpush.msra.mxu0 0.0
        %487 = vmatpush.msra.mxu0 0.0
        %488 = vmatpush.msra.mxu0 0.0
        %489 = vmatpush.msra.mxu0 0.0
        %490 = vmatpush.msra.mxu0 0.0
        %491 = vmatpush.msra.mxu0 0.0
        %v492 = vand.u32 %v334, 4294901760
        %493 = vmatpush.msra.mxu0 %v492
        %v494 = vand.u32 %v379, 4294901760
        %v495 = vsub.f32 %v379, %v494
        %v496 = vand.u32 %v495, 4294901760
        %497 = vmatmul.f32.gmra.mxu0 %v496
        %v498 = vpop.f32.mrf.mxu0
        %v499 = vadd.f32 %v470, %v498
        %v500 = vand.u32 %v382, 4294901760
        %v501 = vsub.f32 %v382, %v500
        %v502 = vand.u32 %v501, 4294901760
        %503 = vmatmul.f32.gmra.mxu0 %v502
        %v504 = vpop.f32.mrf.mxu0
        %v505 = vadd.f32 %v475, %v504
        %506 = vdwg.mxu0
        %507 = vmatpush.msra.mxu0 0.0
        %508 = vmatpush.msra.mxu0 0.0
        %509 = vmatpush.msra.mxu0 0.0
        %510 = vmatpush.msra.mxu0 0.0
        %511 = vmatpush.msra.mxu0 0.0
        %512 = vmatpush.msra.mxu0 0.0
        %513 = vmatpush.msra.mxu0 0.0
        %514 = vmatpush.msra.mxu0 0.0
        %515 = vmatpush.msra.mxu0 0.0
        %516 = vmatpush.msra.mxu0 0.0
        %517 = vmatpush.msra.mxu0 0.0
        %518 = vmatpush.msra.mxu0 0.0
        %519 = vmatpush.msra.mxu0 0.0
        %520 = vmatpush.msra.mxu0 0.0
        %521 = vmatpush.msra.mxu0 0.0
        %v522 = vand.u32 %v334, 4294901760
        %v523 = vsub.f32 %v334, %v522
        %v524 = vand.u32 %v523, 4294901760
        %525 = vmatpush.msra.mxu0 %v524
        %v526 = vand.u32 %v379, 4294901760
        %527 = vmatmul.f32.gmra.mxu0 %v526
        %v528 = vpop.f32.mrf.mxu0
        %v529 = vadd.f32 %v499, %v528
        %v530 = vand.u32 %v382, 4294901760
        %531 = vmatmul.f32.gmra.mxu0 %v530
        %v532 = vpop.f32.mrf.mxu0
        %v533 = vadd.f32 %v505, %v532
        %534 = vdwg.mxu0
        %535 = vmatpush.msra.mxu0 0.0
        %536 = vmatpush.msra.mxu0 0.0
        %537 = vmatpush.msra.mxu0 0.0
        %538 = vmatpush.msra.mxu0 0.0
        %539 = vmatpush.msra.mxu0 0.0
        %540 = vmatpush.msra.mxu0 0.0
        %541 = vmatpush.msra.mxu0 0.0
        %542 = vmatpush.msra.mxu0 0.0
        %543 = vmatpush.msra.mxu0 0.0
        %544 = vmatpush.msra.mxu0 0.0
        %545 = vmatpush.msra.mxu0 0.0
        %546 = vmatpush.msra.mxu0 0.0
        %547 = vmatpush.msra.mxu0 0.0
        %548 = vmatpush.msra.mxu0 0.0
        %549 = vmatpush.msra.mxu0 0.0
        %v550 = vand.u32 %v334, 4294901760
        %551 = vmatpush.msra.mxu0 %v550
        %v552 = vand.u32 %v379, 4294901760
        %553 = vmatmul.f32.gmra.mxu0 %v552
        %v554 = vpop.f32.mrf.mxu0
        %v555 = vadd.f32 %v529, %v554
        %v556 = vand.u32 %v382, 4294901760
        %557 = vmatmul.f32.gmra.mxu0 %v556
        %v558 = vpop.f32.mrf.mxu0
        %v559 = vadd.f32 %v533, %v558
        %560 = vdwg.mxu0
        %vm561 = vcmask 261120
        %562 = vst.msk [vmem:[%s320] sm:$0xff] %vm561, %v555
        %563 = vst.msk [vmem:[%s320 + $0x8] sm:$0xff] %vm561, %v559
        %s564 = sand.u32 %s164, 1
        %s565 = scalar_lea.sflag [#allocation6], %s564
        %s566 = sand.u32 %s164, 1
        %s567 = smul.addr %s566, 16
        %s568 = scalar_lea.vmem [#allocation12], %s567
        // Predicated region
        $region53: #{_interpolate_pallas.1} parent=35 // pred_check
          %p569 = pneg %p174
        $region54: #{_interpolate_pallas.1} parent=35 // pred_check_branch
          %571 = sbr.rel (%p569) target = $region56
        $region55: #{_interpolate_pallas.1} parent=35 // pred_region
          %s572 = smul.u32 2, %s37
          %574 = vsyncadd %s565, 0
          %s575 = smul.addr %s36, 2
          %s576 = sadd.s32 %s572, %s575
          %s577 = smul.addr %s576, 8
          %s578 = scalar_lea.hbm %s5, %s577
          %s579 = sshll.u32 %s568, 4
          %s580 = int_to_ptr.vmem [resolvable:$true] %s579
          %s581 = sshll.u32 %s578, 4
          %s582 = int_to_ptr.hbm [resolvable:$true] %s581
          %587 = dma.vmem_to_hbm [thread:$0]  %s580, 256, %s582, %s565, 128, 128, 8
        $region56: #{_interpolate_pallas.1} parent=35 // pred_fallthru
          _
      $region36: #{_interpolate_pallas.1} parent=5 // pred_fallthru
        _
      %p588 = scmp.le.s32.totalorder 2, %s27
      // Predicated region
      $region57: #{_interpolate_pallas.1} parent=5 // pred_check
        %p589 = pneg %p588
      $region58: #{_interpolate_pallas.1} parent=5 // pred_check_branch
        %591 = sbr.rel (%p589) target = $region60
      $region59: #{_interpolate_pallas.1} parent=5 // pred_region
        %s592 = ssub.s32 %s27, 2
        // Predicated region
        $region61: #{_interpolate_pallas.1} parent=59 // pred_check
          %p593 = pneg %p180
        $region62: #{_interpolate_pallas.1} parent=59 // pred_check_branch
          %595 = sbr.rel (%p593) target = $region64
        $region63: #{_interpolate_pallas.1} parent=59 // pred_region
          %s596 = sand.u32 %s165, 1
          %s597 = scalar_lea.sflag [#allocation6], %s596
          %s598 = sand.u32 %s165, 1
          %s599 = smul.addr %s598, 16
          %s600 = scalar_lea.vmem [#allocation12], %s599
          %602 = dma.done %s597, 256
        $region64: #{_interpolate_pallas.1} parent=59 // pred_fallthru
          _
      $region60: #{_interpolate_pallas.1} parent=5 // pred_fallthru
        _
    $region6: #{_interpolate_pallas.1} parent=1 // loop_footer
      %s31 = sadd.s32 1, %s27
    $region7: #{_interpolate_pallas.1} parent=1 // loop_footer_branch
      %26 = sbr.rel target = $region3
    $region8: #{_interpolate_pallas.1} parent=1 // loop_exit
      _
    %603 = vsyncpa [#allocation5], 1
    %s604 = scalar_lea.sflag [#allocation5], 1
    %605 = vsyncpa %s604, 1
    %606 = vsyncpa [#allocation8], 1
    %607 = vsyncpa [#allocation11], 1
    %s608 = scalar_lea.sflag [#allocation11], 1
    %609 = vsyncpa %s608, 1
    %610 = vsyncpa [#allocation6], 1
    %s611 = scalar_lea.sflag [#allocation6], 1
    %612 = vsyncpa %s611, 1

</llo_original>
